<compile_context>
chip_gen: v6e
topology: v6e:2x2x1
jax: 0.10.0
libtpu: 0.0.40
codegen_flags: <defaults>
</compile_context>

<pallas_src>
import jax
import jax.numpy as jnp
from jax.experimental import pallas as pl
from jax.experimental.pallas import tpu as pltpu


def _round_up(v: int, m: int) -> int:
    return ((v + m - 1) // m) * m


def _svr_linear_kernel(x_ref, w_ref, b_ref, o_ref):
    # x_ref: (TB, K), w_ref: (K, Np), b_ref: (1, Np), o_ref: (TB, Np)
    acc = jnp.dot(x_ref[...], w_ref[...], preferred_element_type=jnp.float32)
    o_ref[...] = (acc + b_ref[...].astype(jnp.float32)).astype(o_ref.dtype)


def prepare_svr_params(weight, bias=None, *, param_dtype=None):
    """One-time preparation of the static nn.Linear parameters.

    weight: (N, K)  (PyTorch nn.Linear layout), bias: (N,) or None.
    Returns (w_t, b_row, n_out) with w_t: (K, Np) lane-dense & pre-transposed,
    b_row: (1, Np), Np = round_up(N, 128).
    """
    N, K = weight.shape
    Np = _round_up(N, 128)
    w = weight if param_dtype is None else weight.astype(param_dtype)
    if Np != N:
        w = jnp.pad(w, ((0, Np - N), (0, 0)))
    w_t = jnp.asarray(w.T)  # (K, Np); one-time cost, weight is static.
    if bias is None:
        b_row = jnp.zeros((1, Np), dtype=w_t.dtype)
    else:
        b = bias if param_dtype is None else bias.astype(param_dtype)
        b_row = b.reshape(1, N)
        if Np != N:
            b_row = jnp.pad(b_row, ((0, 0), (0, Np - N)))
    return w_t, b_row, N


def svr_forward_prepared(x, w_t, b_row, n_out, *, block_b: int = 2048,
                         allow_fast_path: bool = True,
                         return_padded: bool = False):
    """Forward pass y = x @ W^T + b using pre-padded/pre-transposed params."""
    B, K = x.shape
    Kw, Np = w_t.shape
    assert Kw == K, f"weight K ({Kw}) != x K ({K})"
    itemsize = jnp.dtype(x.dtype).itemsize

    # Tiny problems: custom-call dispatch dominates; let XLA fuse a plain dot.
    if allow_fast_path and B * K <= 4096:
        y = (jnp.dot(x, w_t, preferred_element_type=jnp.float32)
             + b_row).astype(x.dtype)
        return y if return_padded else y[:, :n_out]

    # Batch tile: multiple of 8 sublanes, capped by block_b.
    tb_cap = max(8, _round_up(block_b, 8))
    if B > tb_cap:
        TB = tb_cap
    elif B >= 1024:
        # v7x megacore: give the "parallel" batch axis >= 2 grid steps.
        TB = _round_up(pl.cdiv(B, 2), 8)
    else:
        TB = _round_up(B, 8)

    # VMEM footprint: double-buffered x/out tiles + (double-buffered) W + bias.
    def vmem_bytes(tb):
        return (2 * tb * (K + Np) + 2 * (K * Np + Np)) * itemsize

    vmem_budget = 24 << 20  # conservative across v5e/v6e/v7x scoped defaults
    while vmem_bytes(TB) > vmem_budget and TB > 512:
        TB = max(512, _round_up(TB // 2, 8))

    grid = (pl.cdiv(B, TB),)
    vmem_limit = int(min(64 << 20, max(vmem_bytes(TB) + (4 << 20), 16 << 20)))

    cost = pl.CostEstimate(
        flops=2 * B * K * Np,
        transcendentals=0,
        bytes_accessed=itemsize * (B * K + K * Np + Np + B * Np),
    )

    out = pl.pallas_call(
        _svr_linear_kernel,
        out_shape=jax.ShapeDtypeStruct((B, Np), x.dtype),
        grid_spec=pltpu.PrefetchScalarGridSpec(
            num_scalar_prefetch=0,
            grid=grid,
            in_specs=[
                # x tile: pipelined (double-buffered) over the batch grid;
                # the last block may be ragged (OOB reads padded).
                pl.BlockSpec((TB, K), lambda i: (i, 0)),
                # weight: same block every step -> stays resident in VMEM.
                pl.BlockSpec((K, Np), lambda i: (0, 0)),
                # bias: resident as well.
                pl.BlockSpec((1, Np), lambda i: (0, 0)),
            ],
            # Lane-dense unmasked stores; ragged last-block writes dropped.
            out_specs=pl.BlockSpec((TB, Np), lambda i: (i, 0)),
        ),
        compiler_params=pltpu.CompilerParams(
            dimension_semantics=("parallel",),
            vmem_limit_bytes=vmem_limit,
        ),
        cost_estimate=cost,
    )(x, w_t, b_row)

    return out if return_padded else out[:, :n_out]


def make_svr_net(weight, bias=None, *, block_b: int = 2048):
    """Build an SVR_net forward fn with the static params prepared once."""
    w_t, b_row, n_out = prepare_svr_params(weight, bias)

    def forward(x, *, allow_fast_path: bool = True, return_padded: bool = False):
        return svr_forward_prepared(
            x, w_t, b_row, n_out, block_b=block_b,
            allow_fast_path=allow_fast_path, return_padded=return_padded)

    return forward


if __name__ == "__main__":
    # cfg mirroring the PyTorch module's __init__
    cfg = {"num_in_feature": 32, "num_out_feature": 8, "bias": True}

    key = jax.random.PRNGKey(0)
    kx, kw, kb, kx2, kx3 = jax.random.split(key, 5)

    # nn.Linear parameter shapes: W (out, in), b (out,)
    weight = jax.random.normal(
        kw, (cfg["num_out_feature"], cfg["num_in_feature"]), dtype=jnp.float32
    ) * (1.0 / jnp.sqrt(cfg["num_in_feature"]))
    bias = (
        jax.random.normal(kb, (cfg["num_out_feature"],), dtype=jnp.float32) * 0.1
        if cfg["bias"]
        else None
    )

    svr_net = make_svr_net(weight, bias)
    bias_term = bias if bias is not None else 0.0

    # 1) Shipped SVR config (batch=8): tiny-problem fused-jnp fast path.
    x_small = jax.random.normal(kx, (8, cfg["num_in_feature"]), dtype=jnp.float32)
    y_small = jax.block_until_ready(svr_net(x_small))
    ref_small = x_small @ weight.T + bias_term
    assert y_small.shape == (8, cfg["num_out_feature"])
    assert jnp.allclose(y_small, ref_small, atol=1e-5, rtol=1e-5)

    # 2) Pallas path with a ragged block (B=260, no batch padding of x).
    x_ragged = jax.random.normal(kx2, (260, cfg["num_in_feature"]), dtype=jnp.float32)
    y_ragged = jax.block_until_ready(svr_net(x_ragged))
    ref_ragged = x_ragged @ weight.T + bias_term
    assert y_ragged.shape == (260, cfg["num_out_feature"])
    assert jnp.allclose(y_ragged, ref_ragged, atol=1e-5, rtol=1e-5)

    # 3) Pallas path, multi-step "parallel" grid (B=1024 -> 2 tiles; v7x megacore).
    x_big = jax.random.normal(kx3, (1024, cfg["num_in_feature"]), dtype=jnp.float32)
    y_big = jax.block_until_ready(svr_net(x_big))
    ref_big = x_big @ weight.T + bias_term
    assert y_big.shape == (1024, cfg["num_out_feature"])
    assert jnp.allclose(y_big, ref_big, atol=1e-5, rtol=1e-5)

    print("KERNEL_OK")
</pallas_src>

<mosaic_0001>
module attributes {stable_mosaic.version = 11 : i64} {
  func.func @_svr_linear_kernel(%arg0: i32, %arg1: memref<264x32xf32, #tpu.memory_space<vmem>>, %arg2: memref<32x128xf32, #tpu.memory_space<vmem>>, %arg3: memref<1x128xf32, #tpu.memory_space<vmem>>, %arg4: memref<264x128xf32, #tpu.memory_space<vmem>>) attributes {dimension_semantics = [#tpu.dimension_semantics<parallel>], iteration_bounds = array<i64: 1>, scalar_prefetch = 0 : i64, scratch_operands = 0 : i64, tpu.core_type = #tpu.core_type<tc>, window_params = [{transform_indices = @transform_0, window_bounds = array<i64: 264, 32>}, {pipeline_mode = #tpu.pipeline_mode<synchronous>, transform_indices = @transform_1, window_bounds = array<i64: 32, 128>}, {pipeline_mode = #tpu.pipeline_mode<synchronous>, transform_indices = @transform_2, window_bounds = array<i64: 1, 128>}, {transform_indices = @transform_3, window_bounds = array<i64: 264, 128>}]} {
    %c0 = arith.constant 0 : index
    %c0_0 = arith.constant 0 : index
    %0 = vector.load %arg1[%c0, %c0_0] : memref<264x32xf32, #tpu.memory_space<vmem>>, vector<264x32xf32>
    %c0_1 = arith.constant 0 : index
    %c0_2 = arith.constant 0 : index
    %1 = vector.load %arg2[%c0_1, %c0_2] : memref<32x128xf32, #tpu.memory_space<vmem>>, vector<32x128xf32>
    %cst = arith.constant dense<0.000000e+00> : vector<264x128xf32>
    %2 = tpu.matmul %0, %1, %cst {dimension_numbers = #tpu.dot_dimension_numbers<[1], [0], [0], [1], [0, 0, 1, 1], [], []>} : vector<264x32xf32>, vector<32x128xf32>, vector<264x128xf32> -> vector<264x128xf32>
    %c0_3 = arith.constant 0 : index
    %c0_4 = arith.constant 0 : index
    %3 = vector.load %arg3[%c0_3, %c0_4] : memref<1x128xf32, #tpu.memory_space<vmem>>, vector<1x128xf32>
    %4 = vector.broadcast %3 : vector<1x128xf32> to vector<264x128xf32>
    %5 = arith.addf %2, %4 : vector<264x128xf32>
    %c0_5 = arith.constant 0 : index
    %c0_6 = arith.constant 0 : index
    %6 = vector.load %arg4[%c0_5, %c0_6] : memref<264x128xf32, #tpu.memory_space<vmem>>, vector<264x128xf32>
    tpu.vector_store %arg4[%c0_5, %c0_6], %5 {strides = array<i32>} : memref<264x128xf32, #tpu.memory_space<vmem>>, vector<264x128xf32>,
    return
  }
  func.func @transform_0(%arg0: i32) -> (i32, i32) {
    %c0_i32 = arith.constant 0 : i32
    %c0_i32_0 = arith.constant 0 : i32
    return %arg0, %c0_i32 : i32, i32
  }
  func.func @transform_1(%arg0: i32) -> (i32, i32) {
    %c0_i32 = arith.constant 0 : i32
    %c0_i32_0 = arith.constant 0 : i32
    %c0_i32_1 = arith.constant 0 : i32
    return %c0_i32, %c0_i32_0 : i32, i32
  }
  func.func @transform_2(%arg0: i32) -> (i32, i32) {
    %c0_i32 = arith.constant 0 : i32
    %c0_i32_0 = arith.constant 0 : i32
    %c0_i32_1 = arith.constant 0 : i32
    return %c0_i32, %c0_i32_0 : i32, i32
  }
  func.func @transform_3(%arg0: i32) -> (i32, i32) {
    %c0_i32 = arith.constant 0 : i32
    %c0_i32_0 = arith.constant 0 : i32
    return %arg0, %c0_i32 : i32, i32
  }
}

</mosaic_0001>

<llo_original>
// kernel: tpu_custom_call.1
$region0: #{tpu_custom_call.1}
  #allocation0 [shape = 'u32[]', space=smem, size = 0x4, offset = 0x4, fixed_abs, tag = 'smem constant byte address 0x4 - core index']
  #allocation1 [shape = 'u32[144,128]{1,0:T(1,128)}', space=vmem, size = 0x12000, scoped, tag = 'internal scratch']
  %s0 = inlined_call_operand.vmem [shape: f32[260,32], index: 0, kind: input, shape index: {}]
  %s1 = inlined_call_operand.vmem [shape: f32[32,128], index: 1, kind: input, shape index: {}]
  %s2 = inlined_call_operand.vmem [shape: f32[1,128], index: 2, kind: input, shape index: {}]
  %s3 = inlined_call_operand.hbm [shape: f32[260,128], index: 3, kind: output, shape index: {}]
  %s4 = sld [smem:[#allocation0]]
  $region22: #{tpu_custom_call.1} parent=0
    _
  %s6 = ssub.s32 1, %s4
  %s7 = scalar_select 0, %s6, %s4
  $region1: #{tpu_custom_call.1} parent=0
    #allocation2 [shape = 'u8[135168]{0}', space=vmem, size = 0x21000, scoped, tag = 'output window, operand 0, single buffered']
    #allocation3 [shape = 's32[1]{0}', space=sflag, size = 0x4, scoped, tag = 'scoped memory for tpu_custom_call.1']
    %8 = vsyncpa [#allocation3], 0
    // Predicated region
    $region2: #{tpu_custom_call.1} parent=1 // pred_check
      _
    $region3: #{tpu_custom_call.1} parent=1 // pred_check_branch
      %10 = sbr.rel (0) target = $region5
    $region4: #{tpu_custom_call.1} parent=1 // pred_region
      _
    $region5: #{tpu_custom_call.1} parent=1 // pred_fallthru
      _
    // Predicated region
    $region6: #{tpu_custom_call.1} parent=1 // pred_check
      _
    $region7: #{tpu_custom_call.1} parent=1 // pred_check_branch
      %12 = sbr.rel (0) target = $region9
    $region8: #{tpu_custom_call.1} parent=1 // pred_region
      _
    $region9: #{tpu_custom_call.1} parent=1 // pred_fallthru
      _
    // Predicated region
    $region10: #{tpu_custom_call.1} parent=1 // pred_check
      _
    $region11: #{tpu_custom_call.1} parent=1 // pred_check_branch
      %14 = sbr.rel (0) target = $region13
    $region12: #{tpu_custom_call.1} parent=1 // pred_region
      _
    $region13: #{tpu_custom_call.1} parent=1 // pred_fallthru
      _
    %v15 = vld [vmem:[%s0] sm:$0xff]
    %v16 = vld [vmem:[%s0 + $0x8] sm:$0xff]
    %v17 = vld [vmem:[%s0 + $0x10] sm:$0xff]
    %v18 = vld [vmem:[%s0 + $0x18] sm:$0xff]
    %v19 = vld [vmem:[%s0 + $0x20] sm:$0xff]
    %v20 = vld [vmem:[%s0 + $0x28] sm:$0xff]
    %v21 = vld [vmem:[%s0 + $0x30] sm:$0xff]
    %v22 = vld [vmem:[%s0 + $0x38] sm:$0xff]
    %v23 = vld [vmem:[%s0 + $0x40] sm:$0xff]
    %v24 = vld [vmem:[%s0 + $0x48] sm:$0xff]
    %v25 = vld [vmem:[%s0 + $0x50] sm:$0xff]
    %v26 = vld [vmem:[%s0 + $0x58] sm:$0xff]
    %v27 = vld [vmem:[%s0 + $0x60] sm:$0xff]
    %v28 = vld [vmem:[%s0 + $0x68] sm:$0xff]
    %v29 = vld [vmem:[%s0 + $0x70] sm:$0xff]
    %v30 = vld [vmem:[%s0 + $0x78] sm:$0xff]
    %v31 = vld [vmem:[%s0 + $0x80] sm:$0xff]
    %v32 = vld [vmem:[%s0 + $0x88] sm:$0xff]
    %v33 = vld [vmem:[%s0 + $0x90] sm:$0xff]
    %v34 = vld [vmem:[%s0 + $0x98] sm:$0xff]
    %v35 = vld [vmem:[%s0 + $0xa0] sm:$0xff]
    %v36 = vld [vmem:[%s0 + $0xa8] sm:$0xff]
    %v37 = vld [vmem:[%s0 + $0xb0] sm:$0xff]
    %v38 = vld [vmem:[%s0 + $0xb8] sm:$0xff]
    %v39 = vld [vmem:[%s0 + $0xc0] sm:$0xff]
    %v40 = vld [vmem:[%s0 + $0xc8] sm:$0xff]
    %v41 = vld [vmem:[%s0 + $0xd0] sm:$0xff]
    %v42 = vld [vmem:[%s0 + $0xd8] sm:$0xff]
    %v43 = vld [vmem:[%s0 + $0xe0] sm:$0xff]
    %v44 = vld [vmem:[%s0 + $0xe8] sm:$0xff]
    %v45 = vld [vmem:[%s0 + $0xf0] sm:$0xff]
    %v46 = vld [vmem:[%s0 + $0xf8] sm:$0xff]
    %v47 = vld [vmem:[%s0 + $0x100] sm:$0xff]
    %v48 = vld [vmem:[%s1] sm:$0xff]
    %v49 = vld [vmem:[%s1 + $0x8] sm:$0xff]
    %v50 = vld [vmem:[%s1 + $0x10] sm:$0xff]
    %v51 = vld [vmem:[%s1 + $0x18] sm:$0xff]
    %v52 = vld [vmem:[%s2] sm:$0x1]
    %v54 = vlaneseq
    %v55 = vshrl.u32 %v54, 7
    %v56 = vsub.s32 0, %v55
    %v57 = vrot.slane %v52, %v56
    %vm59 = vcmask 261120
    %v61 = vsel %vm59, %v15, 0
    %v64 = vsel %vm59, %v16, 0
    %v67 = vsel %vm59, %v17, 0
    %v70 = vsel %vm59, %v18, 0
    %v73 = vsel %vm59, %v19, 0
    %v76 = vsel %vm59, %v20, 0
    %v79 = vsel %vm59, %v21, 0
    %v82 = vsel %vm59, %v22, 0
    %v85 = vsel %vm59, %v23, 0
    %v88 = vsel %vm59, %v24, 0
    %v91 = vsel %vm59, %v25, 0
    %v94 = vsel %vm59, %v26, 0
    %v97 = vsel %vm59, %v27, 0
    %v100 = vsel %vm59, %v28, 0
    %v103 = vsel %vm59, %v29, 0
    %v106 = vsel %vm59, %v30, 0
    %v109 = vsel %vm59, %v31, 0
    %v112 = vsel %vm59, %v32, 0
    %v115 = vsel %vm59, %v33, 0
    %v118 = vsel %vm59, %v34, 0
    %v121 = vsel %vm59, %v35, 0
    %v124 = vsel %vm59, %v36, 0
    %v127 = vsel %vm59, %v37, 0
    %v130 = vsel %vm59, %v38, 0
    %v133 = vsel %vm59, %v39, 0
    %v136 = vsel %vm59, %v40, 0
    %v139 = vsel %vm59, %v41, 0
    %v142 = vsel %vm59, %v42, 0
    %v145 = vsel %vm59, %v43, 0
    %v148 = vsel %vm59, %v44, 0
    %v151 = vsel %vm59, %v45, 0
    %v154 = vsel %vm59, %v46, 0
    %v157 = vsel %vm59, %v47, 0
    %159 = vmatprep.subr.mxu0 0.0
    %160 = vmatpush1.msra.mxu0 0.0
    %161 = vmatprep.subr.mxu0 0.0
    %162 = vmatpush1.msra.mxu0 0.0
    %163 = vmatprep.subr.mxu0 0.0
    %164 = vmatpush1.msra.mxu0 0.0
    %165 = vmatprep.subr.mxu0 0.0
    %166 = vmatpush1.msra.mxu0 0.0
    %167 = vmatprep.subr.mxu0 0.0
    %168 = vmatpush1.msra.mxu0 0.0
    %169 = vmatprep.subr.mxu0 0.0
    %170 = vmatpush1.msra.mxu0 0.0
    %171 = vmatprep.subr.mxu0 0.0
    %172 = vmatpush1.msra.mxu0 0.0
    %173 = vmatprep.subr.mxu0 0.0
    %174 = vmatpush1.msra.mxu0 0.0
    %175 = vmatprep.subr.mxu0 0.0
    %176 = vmatpush1.msra.mxu0 0.0
    %177 = vmatprep.subr.mxu0 0.0
    %178 = vmatpush1.msra.mxu0 0.0
    %179 = vmatprep.subr.mxu0 0.0
    %180 = vmatpush1.msra.mxu0 0.0
    %181 = vmatprep.subr.mxu0 0.0
    %182 = vmatpush1.msra.mxu0 0.0
    %183 = vmatprep.subr.mxu0 0.0
    %184 = vmatpush1.msra.mxu0 %v51
    %185 = vmatprep.subr.mxu0 0.0
    %186 = vmatpush1.msra.mxu0 %v50
    %187 = vmatprep.subr.mxu0 0.0
    %188 = vmatpush1.msra.mxu0 %v49
    %189 = vmatprep.subr.mxu0 0.0
    %190 = vmatpush1.msra.mxu0 %v48
    %191 = vmatprep.subr.mxu0 0.0
    %192 = vmatpush2.msra.mxu0 0.0
    %193 = vmatprep.subr.mxu0 0.0
    %194 = vmatpush2.msra.mxu0 0.0
    %195 = vmatprep.subr.mxu0 0.0
    %196 = vmatpush2.msra.mxu0 0.0
    %197 = vmatprep.subr.mxu0 0.0
    %198 = vmatpush2.msra.mxu0 0.0
    %199 = vmatprep.subr.mxu0 0.0
    %200 = vmatpush2.msra.mxu0 0.0
    %201 = vmatprep.subr.mxu0 0.0
    %202 = vmatpush2.msra.mxu0 0.0
    %203 = vmatprep.subr.mxu0 0.0
    %204 = vmatpush2.msra.mxu0 0.0
    %205 = vmatprep.subr.mxu0 0.0
    %206 = vmatpush2.msra.mxu0 0.0
    %207 = vmatprep.subr.mxu0 0.0
    %208 = vmatpush2.msra.mxu0 0.0
    %209 = vmatprep.subr.mxu0 0.0
    %210 = vmatpush2.msra.mxu0 0.0
    %211 = vmatprep.subr.mxu0 0.0
    %212 = vmatpush2.msra.mxu0 0.0
    %213 = vmatprep.subr.mxu0 0.0
    %214 = vmatpush2.msra.mxu0 0.0
    %215 = vmatprep.subr.mxu0 0.0
    %216 = vmatpush2.msra.mxu0 0.0
    %217 = vmatprep.subr.mxu0 0.0
    %218 = vmatpush2.msra.mxu0 0.0
    %219 = vmatprep.subr.mxu0 0.0
    %220 = vmatpush2.msra.mxu0 0.0
    %221 = vmatprep.subr.mxu0 0.0
    %222 = vmatpush2.msra.mxu0 0.0
    %223 = vmatprep.mubr.f32.mxu0 0.0
    %224 = vmatmul.mubr.f32.gmra.mxu0 %v61
    %v225 = vpop.f32.mrf.mxu0
    %v226 = vadd.f32 %v57, %v225
    %v227 = vpop.f32.mrf.mxu0
    %228 = vmatprep.mubr.f32.mxu0 0.0
    %229 = vmatmul.mubr.f32.gmra.mxu0 %v64
    %v230 = vpop.f32.mrf.mxu0
    %v231 = vadd.f32 %v57, %v230
    %v232 = vpop.f32.mrf.mxu0
    %233 = vmatprep.mubr.f32.mxu0 0.0
    %234 = vmatmul.mubr.f32.gmra.mxu0 %v67
    %v235 = vpop.f32.mrf.mxu0
    %v236 = vadd.f32 %v57, %v235
    %v237 = vpop.f32.mrf.mxu0
    %238 = vmatprep.mubr.f32.mxu0 0.0
    %239 = vmatmul.mubr.f32.gmra.mxu0 %v70
    %v240 = vpop.f32.mrf.mxu0
    %v241 = vadd.f32 %v57, %v240
    %v242 = vpop.f32.mrf.mxu0
    %243 = vmatprep.mubr.f32.mxu0 0.0
    %244 = vmatmul.mubr.f32.gmra.mxu0 %v73
    %v245 = vpop.f32.mrf.mxu0
    %v246 = vadd.f32 %v57, %v245
    %v247 = vpop.f32.mrf.mxu0
    %248 = vmatprep.mubr.f32.mxu0 0.0
    %249 = vmatmul.mubr.f32.gmra.mxu0 %v76
    %v250 = vpop.f32.mrf.mxu0
    %v251 = vadd.f32 %v57, %v250
    %v252 = vpop.f32.mrf.mxu0
    %253 = vmatprep.mubr.f32.mxu0 0.0
    %254 = vmatmul.mubr.f32.gmra.mxu0 %v79
    %v255 = vpop.f32.mrf.mxu0
    %v256 = vadd.f32 %v57, %v255
    %v257 = vpop.f32.mrf.mxu0
    %258 = vmatprep.mubr.f32.mxu0 0.0
    %259 = vmatmul.mubr.f32.gmra.mxu0 %v82
    %v260 = vpop.f32.mrf.mxu0
    %v261 = vadd.f32 %v57, %v260
    %v262 = vpop.f32.mrf.mxu0
    %263 = vmatprep.mubr.f32.mxu0 0.0
    %264 = vmatmul.mubr.f32.gmra.mxu0 %v85
    %v265 = vpop.f32.mrf.mxu0
    %v266 = vadd.f32 %v57, %v265
    %v267 = vpop.f32.mrf.mxu0
    %268 = vmatprep.mubr.f32.mxu0 0.0
    %269 = vmatmul.mubr.f32.gmra.mxu0 %v88
    %v270 = vpop.f32.mrf.mxu0
    %v271 = vadd.f32 %v57, %v270
    %v272 = vpop.f32.mrf.mxu0
    %273 = vmatprep.mubr.f32.mxu0 0.0
    %274 = vmatmul.mubr.f32.gmra.mxu0 %v91
    %v275 = vpop.f32.mrf.mxu0
    %v276 = vadd.f32 %v57, %v275
    %v277 = vpop.f32.mrf.mxu0
    %278 = vmatprep.mubr.f32.mxu0 0.0
    %279 = vmatmul.mubr.f32.gmra.mxu0 %v94
    %v280 = vpop.f32.mrf.mxu0
    %v281 = vadd.f32 %v57, %v280
    %v282 = vpop.f32.mrf.mxu0
    %283 = vmatprep.mubr.f32.mxu0 0.0
    %284 = vmatmul.mubr.f32.gmra.mxu0 %v97
    %v285 = vpop.f32.mrf.mxu0
    %v286 = vadd.f32 %v57, %v285
    %v287 = vpop.f32.mrf.mxu0
    %288 = vmatprep.mubr.f32.mxu0 0.0
    %289 = vmatmul.mubr.f32.gmra.mxu0 %v100
    %v290 = vpop.f32.mrf.mxu0
    %v291 = vadd.f32 %v57, %v290
    %v292 = vpop.f32.mrf.mxu0
    %293 = vmatprep.mubr.f32.mxu0 0.0
    %294 = vmatmul.mubr.f32.gmra.mxu0 %v103
    %v295 = vpop.f32.mrf.mxu0
    %v296 = vadd.f32 %v57, %v295
    %v297 = vpop.f32.mrf.mxu0
    %298 = vmatprep.mubr.f32.mxu0 0.0
    %299 = vmatmul.mubr.f32.gmra.mxu0 %v106
    %v300 = vpop.f32.mrf.mxu0
    %v301 = vadd.f32 %v57, %v300
    %v302 = vpop.f32.mrf.mxu0
    %303 = vmatprep.mubr.f32.mxu0 0.0
    %304 = vmatmul.mubr.f32.gmra.mxu0 %v109
    %v305 = vpop.f32.mrf.mxu0
    %v306 = vadd.f32 %v57, %v305
    %v307 = vpop.f32.mrf.mxu0
    %308 = vmatprep.mubr.f32.mxu0 0.0
    %309 = vmatmul.mubr.f32.gmra.mxu0 %v112
    %v310 = vpop.f32.mrf.mxu0
    %v311 = vadd.f32 %v57, %v310
    %v312 = vpop.f32.mrf.mxu0
    %313 = vmatprep.mubr.f32.mxu0 0.0
    %314 = vmatmul.mubr.f32.gmra.mxu0 %v115
    %v315 = vpop.f32.mrf.mxu0
    %v316 = vadd.f32 %v57, %v315
    %v317 = vpop.f32.mrf.mxu0
    %318 = vmatprep.mubr.f32.mxu0 0.0
    %319 = vmatmul.mubr.f32.gmra.mxu0 %v118
    %v320 = vpop.f32.mrf.mxu0
    %v321 = vadd.f32 %v57, %v320
    %v322 = vpop.f32.mrf.mxu0
    %323 = vmatprep.mubr.f32.mxu0 0.0
    %324 = vmatmul.mubr.f32.gmra.mxu0 %v121
    %v325 = vpop.f32.mrf.mxu0
    %v326 = vadd.f32 %v57, %v325
    %v327 = vpop.f32.mrf.mxu0
    %328 = vmatprep.mubr.f32.mxu0 0.0
    %329 = vmatmul.mubr.f32.gmra.mxu0 %v124
    %v330 = vpop.f32.mrf.mxu0
    %v331 = vadd.f32 %v57, %v330
    %v332 = vpop.f32.mrf.mxu0
    %333 = vmatprep.mubr.f32.mxu0 0.0
    %334 = vmatmul.mubr.f32.gmra.mxu0 %v127
    %v335 = vpop.f32.mrf.mxu0
    %v336 = vadd.f32 %v57, %v335
    %v337 = vpop.f32.mrf.mxu0
    %338 = vmatprep.mubr.f32.mxu0 0.0
    %339 = vmatmul.mubr.f32.gmra.mxu0 %v130
    %v340 = vpop.f32.mrf.mxu0
    %v341 = vadd.f32 %v57, %v340
    %v342 = vpop.f32.mrf.mxu0
    %343 = vmatprep.mubr.f32.mxu0 0.0
    %344 = vmatmul.mubr.f32.gmra.mxu0 %v133
    %v345 = vpop.f32.mrf.mxu0
    %v346 = vadd.f32 %v57, %v345
    %v347 = vpop.f32.mrf.mxu0
    %348 = vmatprep.mubr.f32.mxu0 0.0
    %349 = vmatmul.mubr.f32.gmra.mxu0 %v136
    %v350 = vpop.f32.mrf.mxu0
    %v351 = vadd.f32 %v57, %v350
    %v352 = vpop.f32.mrf.mxu0
    %353 = vmatprep.mubr.f32.mxu0 0.0
    %354 = vmatmul.mubr.f32.gmra.mxu0 %v139
    %v355 = vpop.f32.mrf.mxu0
    %v356 = vadd.f32 %v57, %v355
    %v357 = vpop.f32.mrf.mxu0
    %358 = vmatprep.mubr.f32.mxu0 0.0
    %359 = vmatmul.mubr.f32.gmra.mxu0 %v142
    %v360 = vpop.f32.mrf.mxu0
    %v361 = vadd.f32 %v57, %v360
    %v362 = vpop.f32.mrf.mxu0
    %363 = vmatprep.mubr.f32.mxu0 0.0
    %364 = vmatmul.mubr.f32.gmra.mxu0 %v145
    %v365 = vpop.f32.mrf.mxu0
    %v366 = vadd.f32 %v57, %v365
    %v367 = vpop.f32.mrf.mxu0
    %368 = vmatprep.mubr.f32.mxu0 0.0
    %369 = vmatmul.mubr.f32.gmra.mxu0 %v148
    %v370 = vpop.f32.mrf.mxu0
    %v371 = vadd.f32 %v57, %v370
    %v372 = vpop.f32.mrf.mxu0
    %373 = vmatprep.mubr.f32.mxu0 0.0
    %374 = vmatmul.mubr.f32.gmra.mxu0 %v151
    %v375 = vpop.f32.mrf.mxu0
    %v376 = vadd.f32 %v57, %v375
    %v377 = vpop.f32.mrf.mxu0
    %378 = vmatprep.mubr.f32.mxu0 0.0
    %379 = vmatmul.mubr.f32.gmra.mxu0 %v154
    %v380 = vpop.f32.mrf.mxu0
    %v381 = vadd.f32 %v57, %v380
    %v382 = vpop.f32.mrf.mxu0
    %383 = vmatprep.mubr.f32.mxu0 0.0
    %384 = vmatmul.mubr.f32.gmra.mxu0 %v157
    %v385 = vpop.f32.mrf.mxu0
    %v386 = vadd.f32 %v57, %v385
    %v387 = vpop.f32.mrf.mxu0
    %388 = vdwg.mxu0
    %389 = vst [vmem:[#allocation2] sm:$0xff] %v226
    %390 = vst [vmem:[#allocation2 + $0x8] sm:$0xff] %v231
    %391 = vst [vmem:[#allocation2 + $0x10] sm:$0xff] %v236
    %392 = vst [vmem:[#allocation2 + $0x18] sm:$0xff] %v241
    %393 = vst [vmem:[#allocation2 + $0x20] sm:$0xff] %v246
    %394 = vst [vmem:[#allocation2 + $0x28] sm:$0xff] %v251
    %395 = vst [vmem:[#allocation2 + $0x30] sm:$0xff] %v256
    %396 = vst [vmem:[#allocation2 + $0x38] sm:$0xff] %v261
    %397 = vst [vmem:[#allocation2 + $0x40] sm:$0xff] %v266
    %398 = vst [vmem:[#allocation2 + $0x48] sm:$0xff] %v271
    %399 = vst [vmem:[#allocation2 + $0x50] sm:$0xff] %v276
    %400 = vst [vmem:[#allocation2 + $0x58] sm:$0xff] %v281
    %401 = vst [vmem:[#allocation2 + $0x60] sm:$0xff] %v286
    %402 = vst [vmem:[#allocation2 + $0x68] sm:$0xff] %v291
    %403 = vst [vmem:[#allocation2 + $0x70] sm:$0xff] %v296
    %404 = vst [vmem:[#allocation2 + $0x78] sm:$0xff] %v301
    %405 = vst [vmem:[#allocation2 + $0x80] sm:$0xff] %v306
    %406 = vst [vmem:[#allocation2 + $0x88] sm:$0xff] %v311
    %407 = vst [vmem:[#allocation2 + $0x90] sm:$0xff] %v316
    %408 = vst [vmem:[#allocation2 + $0x98] sm:$0xff] %v321
    %409 = vst [vmem:[#allocation2 + $0xa0] sm:$0xff] %v326
    %410 = vst [vmem:[#allocation2 + $0xa8] sm:$0xff] %v331
    %411 = vst [vmem:[#allocation2 + $0xb0] sm:$0xff] %v336
    %412 = vst [vmem:[#allocation2 + $0xb8] sm:$0xff] %v341
    %413 = vst [vmem:[#allocation2 + $0xc0] sm:$0xff] %v346
    %414 = vst [vmem:[#allocation2 + $0xc8] sm:$0xff] %v351
    %415 = vst [vmem:[#allocation2 + $0xd0] sm:$0xff] %v356
    %416 = vst [vmem:[#allocation2 + $0xd8] sm:$0xff] %v361
    %417 = vst [vmem:[#allocation2 + $0xe0] sm:$0xff] %v366
    %418 = vst [vmem:[#allocation2 + $0xe8] sm:$0xff] %v371
    %419 = vst [vmem:[#allocation2 + $0xf0] sm:$0xff] %v376
    %420 = vst [vmem:[#allocation2 + $0xf8] sm:$0xff] %v381
    %421 = vst [vmem:[#allocation2 + $0x100] sm:$0xff] %v386
    // Predicated region
    $region14: #{tpu_custom_call.1} parent=1 // pred_check
      _
    $region15: #{tpu_custom_call.1} parent=1 // pred_check_branch
      %423 = sbr.rel (0) target = $region17
    $region16: #{tpu_custom_call.1} parent=1 // pred_region
      %s425 = ssub.s32 4224, 4224
      %426 = vsyncadd [#allocation3], %s425
      %s427 = sshll.u32 [#allocation2], 4
      %s428 = int_to_ptr.vmem [resolvable:$true] %s427
      %433 = dma.vmem_to_hbm [thread:$0]  %s428, 4224, %s3, [#allocation3], 128, 128, 8
    $region17: #{tpu_custom_call.1} parent=1 // pred_fallthru
      _
    // Predicated region
    $region18: #{tpu_custom_call.1} parent=1 // pred_check
      _
    $region19: #{tpu_custom_call.1} parent=1 // pred_check_branch
      %435 = sbr.rel (0) target = $region21
    $region20: #{tpu_custom_call.1} parent=1 // pred_region
      %436 = dma.done [#allocation3], 4224
    $region21: #{tpu_custom_call.1} parent=1 // pred_fallthru
      _
    %437 = vsyncpa [#allocation3], 1

</llo_original>
